<compile_context>
chip_gen: v7x
topology: tpu7x:2x2x1
jax: 0.10.0
libtpu: 0.0.40
codegen_flags: <defaults>
</compile_context>

<pallas_src>
import functools

import jax
import jax.numpy as jnp
from jax.experimental import pallas as pl
from jax.experimental.pallas import tpu as pltpu

CLASS_NUM = 7
GAMMA = 3
SIZE_AVERAGE = True

# Tiling knobs (lanes == examples on the last axis).
_TARGET_TILE_LANES = 128 * 1024          # ~128K examples per tile for large N
_MIN_PARALLEL_TILES = 8                  # keep >=8 tiles so both v7x TCs get work
_VMEM_INPUT_CAP_BYTES = 24 * 1024 * 1024  # double-buffered input cap (v7x-safe)


def _focal_loss_kernel(n_true, gamma, has_alpha, *refs):
    """refs = (x_ref[C, TN], t_ref[1, TN], [a_ref[C, 1]], out_ref[8, 128])."""
    if has_alpha:
        x_ref, t_ref, a_ref, out_ref = refs
    else:
        x_ref, t_ref, out_ref = refs
        a_ref = None

    x = x_ref[...]                                   # [C, TN] f32, lane-dense
    t = t_ref[...]                                   # [1, TN] i32
    c, tn = x.shape
    i = pl.program_id(0)

    # One-hot class mask via sublane iota compare (scatter_ equivalent on TPU).
    # Kept on VPU+XLU on purpose: an MXU contraction at C=7 would use <3% of
    # the systolic array.
    cls = jax.lax.broadcasted_iota(jnp.int32, (c, tn), 0)
    mask = (cls == t).astype(jnp.float32)            # [C, TN]

    # log-softmax over the class (sublane) axis.  Single exp pass: pt is
    # recovered from e = exp(x - m) with a reciprocal, not a second exp.
    m = jnp.max(x, axis=0, keepdims=True)            # [1, TN]
    e = jnp.exp(x - m)                               # [C, TN]  (only EUP exp)
    sum_e = jnp.sum(e, axis=0, keepdims=True)        # [1, TN]
    e_t = jnp.sum(e * mask, axis=0, keepdims=True)   # exp(target logit - m)
    x_t = jnp.sum(x * mask, axis=0, keepdims=True)   # target logit
    log_pt = x_t - m - jnp.log(sum_e)                # [1, TN]

    # Approx EUP reciprocal + one Newton step (2 VPU FMAs) -> ~f32-exact 1/sum_e.
    r = pl.reciprocal(sum_e, approx=True)
    r = r * (2.0 - sum_e * r)
    pt = e_t * r

    # (1 - p)**gamma with integer gamma via repeated multiplies (VPU only).
    # TODO(synk): non-integer gamma would need a log/exp pow path.
    u = 1.0 - pt
    ug = jnp.ones_like(u)
    for _ in range(int(gamma)):
        ug = ug * u

    loss = -(ug * log_pt)                            # [1, TN]
    if has_alpha:
        a = a_ref[...]                               # [C, 1]
        alpha_n = jnp.sum(a * mask, axis=0, keepdims=True)
        loss = alpha_n * loss
    # (alpha==ones default: gather/multiply specialized away entirely)

    # mask padded tail columns (global column >= true N)
    col = jax.lax.broadcasted_iota(jnp.int32, (1, tn), 1) + i * tn
    loss = jnp.where(col < n_true, loss, 0.0)

    # lane-dense per-tile partial sum; wrapper picks one element per tile
    out_ref[...] = jnp.full((8, 128), jnp.sum(loss), dtype=jnp.float32)


def _choose_tiling(n, c, tile_n):
    """Balanced, VMEM-capped tiling of the lane (example) axis."""
    n128 = ((n + 127) // 128) * 128
    n_blocks = n128 // 128
    # Double-buffered per-lane input bytes: logits c*4 B + targets 4 B, x2 bufs.
    bytes_per_lane_db = 2 * (c * 4 + 4)
    cap_lanes = max(128, (_VMEM_INPUT_CAP_BYTES // bytes_per_lane_db // 128) * 128)
    if tile_n is None:
        # Target ~128K lanes/tile, but keep >= min(8, n_blocks) tiles so the
        # parallel grid axis can be split across both TensorCores on v7x.
        num_tiles = max(pl.cdiv(n128, _TARGET_TILE_LANES),
                        min(_MIN_PARALLEL_TILES, n_blocks))
        tile_n = 128 * pl.cdiv(n_blocks, num_tiles)       # balanced tiles
    else:
        tile_n = max(128, (int(tile_n) // 128) * 128)
    tile_n = min(tile_n, cap_lanes, n128)
    num_tiles = pl.cdiv(n128, tile_n)
    n_pad = num_tiles * tile_n
    return tile_n, num_tiles, n_pad


@functools.partial(jax.jit, static_argnames=("gamma", "size_average", "tile_n"))
def focal_loss(logits, targets, alpha=None, gamma=GAMMA,
               size_average=SIZE_AVERAGE, tile_n=None):
    """logits: [N, C] f32, targets: [N] int -> scalar f32 loss."""
    n, c = logits.shape
    tile_n, num_tiles, n_pad = _choose_tiling(n, c, tile_n)

    # Lane-dense [C, N] layout: classes on sublanes, examples on lanes.
    # TODO(synk): upstream producer should emit [C, N] directly to drop this
    # extra HBM read+write pass (here it at least fuses with cast+pad under jit).
    logits_t = jnp.transpose(logits.astype(jnp.float32))          # [C, N]
    logits_t = jnp.pad(logits_t, ((0, 0), (0, n_pad - n)))
    targets_row = jnp.pad(targets.astype(jnp.int32).reshape(1, n),
                          ((0, 0), (0, n_pad - n)))

    has_alpha = alpha is not None
    args = [logits_t, targets_row]
    in_specs = [
        pl.BlockSpec((c, tile_n), lambda i: (0, i)),
        pl.BlockSpec((1, tile_n), lambda i: (0, i)),
    ]
    if has_alpha:
        alpha_col = jnp.asarray(alpha, dtype=jnp.float32).reshape(c, 1)
        args.append(alpha_col)
        in_specs.append(pl.BlockSpec((c, 1), lambda i: (0, 0)))

    kernel = functools.partial(_focal_loss_kernel, n, int(gamma), has_alpha)

    # VMEM budget: double-buffered inputs + per-tile output block, with slack.
    footprint = 2 * tile_n * (c * 4 + 4) + 2 * (8 * 128 * 4)
    vmem_limit = int(min(max(32 << 20, footprint + (8 << 20)), 48 << 20))

    out = pl.pallas_call(
        kernel,
        out_shape=jax.ShapeDtypeStruct((8, num_tiles * 128), jnp.float32),
        grid=(num_tiles,),
        in_specs=in_specs,
        out_specs=pl.BlockSpec((8, 128), lambda i: (0, i)),
        compiler_params=pltpu.CompilerParams(
            dimension_semantics=("parallel",),
            vmem_limit_bytes=vmem_limit,
        ),
    )(*args)

    partials = out[0, ::128]                         # one partial sum per tile
    total = jnp.sum(partials)
    return total / jnp.float32(n) if size_average else total


def focal_loss_ref(logits, targets, alpha=None, gamma=GAMMA,
                   size_average=SIZE_AVERAGE):
    n, c = logits.shape
    if alpha is None:
        alpha = jnp.ones((c, 1), dtype=jnp.float32)
    alpha = jnp.asarray(alpha, dtype=jnp.float32).reshape(c, 1)
    p = jax.nn.softmax(logits.astype(jnp.float32), axis=1)
    mask = jax.nn.one_hot(targets, c, dtype=jnp.float32)
    probs = jnp.sum(p * mask, axis=1, keepdims=True)
    a = alpha[targets].reshape(-1, 1)
    batch_loss = -a * jnp.power(1.0 - probs, float(gamma)) * jnp.log(probs)
    return jnp.mean(batch_loss) if size_average else jnp.sum(batch_loss)


if __name__ == "__main__":
    key = jax.random.PRNGKey(0)
    k1, k2, k3 = jax.random.split(key, 3)
    N, C = 8, CLASS_NUM
    logits = jax.random.normal(k1, (N, C), dtype=jnp.float32)
    targets = jax.random.randint(k2, (N,), 0, C, dtype=jnp.int32)

    # default alpha (ones) path
    loss = focal_loss(logits, targets)
    jax.block_until_ready(loss)
    ref = focal_loss_ref(logits, targets)
    assert jnp.allclose(loss, ref, rtol=5e-4, atol=1e-6), (loss, ref)

    # explicit alpha path
    alpha = jax.random.uniform(k3, (C, 1), dtype=jnp.float32,
                               minval=0.25, maxval=1.0)
    loss_a = focal_loss(logits, targets, alpha=alpha)
    jax.block_until_ready(loss_a)
    ref_a = focal_loss_ref(logits, targets, alpha=alpha)
    assert jnp.allclose(loss_a, ref_a, rtol=5e-4, atol=1e-6), (loss_a, ref_a)

    # explicit multi-tile grid with a ragged tail (tiling + tail masking)
    N2 = 1000
    logits2 = jax.random.normal(k1, (N2, C), dtype=jnp.float32)
    targets2 = jax.random.randint(k2, (N2,), 0, C, dtype=jnp.int32)
    loss2 = focal_loss(logits2, targets2, tile_n=256)
    jax.block_until_ready(loss2)
    ref2 = focal_loss_ref(logits2, targets2)
    assert jnp.allclose(loss2, ref2, rtol=5e-4, atol=1e-5), (loss2, ref2)

    # auto-tiling path on the same data (balanced tiles, parallel grid)
    loss3 = focal_loss(logits2, targets2)
    jax.block_until_ready(loss3)
    assert jnp.allclose(loss3, ref2, rtol=5e-4, atol=1e-5), (loss3, ref2)

    print("KERNEL_OK")
</pallas_src>

<mosaic_0001>
module attributes {stable_mosaic.version = 11 : i64} {
  func.func @_focal_loss_kernel(%arg0: i32, %arg1: memref<7x128xf32, #tpu.memory_space<vmem>>, %arg2: memref<1x128xi32, #tpu.memory_space<vmem>>, %arg3: memref<8x128xf32, #tpu.memory_space<vmem>>) attributes {dimension_semantics = [#tpu.dimension_semantics<parallel>], iteration_bounds = array<i64: 1>, scalar_prefetch = 0 : i64, scratch_operands = 0 : i64, tpu.core_type = #tpu.core_type<tc>, window_params = [{transform_indices = @transform_0, window_bounds = array<i64: 7, 128>}, {transform_indices = @transform_1, window_bounds = array<i64: 1, 128>}, {transform_indices = @transform_2, window_bounds = array<i64: 8, 128>}]} {
    %c0 = arith.constant 0 : index
    %c0_0 = arith.constant 0 : index
    %0 = vector.load %arg1[%c0, %c0_0] : memref<7x128xf32, #tpu.memory_space<vmem>>, vector<7x128xf32>
    %c0_1 = arith.constant 0 : index
    %c0_2 = arith.constant 0 : index
    %1 = vector.load %arg2[%c0_1, %c0_2] : memref<1x128xi32, #tpu.memory_space<vmem>>, vector<1x128xi32>
    %2 = tpu.iota {dimensions = array<i32: 0>} : vector<7x128xi32>
    %3 = vector.broadcast %1 : vector<1x128xi32> to vector<7x128xi32>
    %4 = arith.cmpi eq, %2, %3 : vector<7x128xi32>
    %5 = arith.extui %4 : vector<7x128xi1> to vector<7x128xi32>
    %6 = arith.sitofp %5 : vector<7x128xi32> to vector<7x128xf32>
    %cst = arith.constant dense<0xFF800000> : vector<128xf32>
    %7 = vector.multi_reduction <maximumf>, %0, %cst [0] : vector<7x128xf32> to vector<128xf32>
    %8 = vector.shape_cast %7 : vector<128xf32> to vector<1x128xf32>
    %9 = vector.broadcast %8 : vector<1x128xf32> to vector<7x128xf32>
    %10 = arith.subf %0, %9 : vector<7x128xf32>
    %11 = math.exp %10 : vector<7x128xf32>
    %cst_3 = arith.constant dense<0.000000e+00> : vector<128xf32>
    %12 = vector.multi_reduction <add>, %11, %cst_3 [0] : vector<7x128xf32> to vector<128xf32>
    %13 = vector.shape_cast %12 : vector<128xf32> to vector<1x128xf32>
    %14 = arith.mulf %11, %6 : vector<7x128xf32>
    %cst_4 = arith.constant dense<0.000000e+00> : vector<128xf32>
    %15 = vector.multi_reduction <add>, %14, %cst_4 [0] : vector<7x128xf32> to vector<128xf32>
    %16 = vector.shape_cast %15 : vector<128xf32> to vector<1x128xf32>
    %17 = arith.mulf %0, %6 : vector<7x128xf32>
    %cst_5 = arith.constant dense<0.000000e+00> : vector<128xf32>
    %18 = vector.multi_reduction <add>, %17, %cst_5 [0] : vector<7x128xf32> to vector<128xf32>
    %19 = vector.shape_cast %18 : vector<128xf32> to vector<1x128xf32>
    %20 = arith.subf %19, %8 : vector<1x128xf32>
    %21 = math.log %13 : vector<1x128xf32>
    %22 = arith.subf %20, %21 : vector<1x128xf32>
    %23 = tpu.reciprocal %13 {approx = true} : vector<1x128xf32> -> vector<1x128xf32>
    %24 = arith.mulf %13, %23 : vector<1x128xf32>
    %cst_6 = arith.constant 2.000000e+00 : f32
    %25 = vector.broadcast %cst_6 : f32 to vector<1x128xf32>
    %26 = arith.subf %25, %24 : vector<1x128xf32>
    %27 = arith.mulf %23, %26 : vector<1x128xf32>
    %28 = arith.mulf %16, %27 : vector<1x128xf32>
    %cst_7 = arith.constant 1.000000e+00 : f32
    %29 = vector.broadcast %cst_7 : f32 to vector<1x128xf32>
    %30 = arith.subf %29, %28 : vector<1x128xf32>
    %cst_8 = arith.constant 1.000000e+00 : f32
    %31 = vector.broadcast %cst_8 : f32 to vector<1x128xf32>
    %32 = arith.mulf %31, %30 : vector<1x128xf32>
    %33 = arith.mulf %32, %30 : vector<1x128xf32>
    %34 = arith.mulf %33, %30 : vector<1x128xf32>
    %35 = arith.mulf %34, %22 : vector<1x128xf32>
    %cst_9 = arith.constant 0.000000e+00 : f32
    %36 = vector.broadcast %cst_9 : f32 to vector<1x128xf32>
    %37 = arith.subf %36, %35 : vector<1x128xf32>
    %38 = tpu.iota {dimensions = array<i32: 1>} : vector<1x128xi32>
    %c128_i32 = arith.constant 128 : i32
    %39 = arith.muli %arg0, %c128_i32 : i32
    %40 = vector.broadcast %39 : i32 to vector<1x128xi32>
    %41 = arith.addi %38, %40 : vector<1x128xi32>
    %c8_i32 = arith.constant 8 : i32
    %42 = vector.broadcast %c8_i32 : i32 to vector<1x128xi32>
    %43 = arith.cmpi slt, %41, %42 : vector<1x128xi32>
    %cst_10 = arith.constant 0.000000e+00 : f32
    %44 = vector.broadcast %cst_10 : f32 to vector<1x128xf32>
    %45 = arith.select %43, %37, %44 : vector<1x128xi1>, vector<1x128xf32>
    %46 = vector.shape_cast %45 : vector<1x128xf32> to vector<1x1x128xf32>
    %cst_11 = arith.constant dense<0.000000e+00> : vector<1xf32>
    %47 = vector.multi_reduction <add>, %46, %cst_11 [1, 2] : vector<1x1x128xf32> to vector<1xf32>
    %48 = vector.shape_cast %47 : vector<1xf32> to vector<1x1x1xf32>
    %49 = vector.extract %48[0, 0, 0] : f32 from vector<1x1x1xf32>
    %50 = vector.broadcast %49 : f32 to vector<8x128xf32>
    %c0_12 = arith.constant 0 : index
    %c0_13 = arith.constant 0 : index
    %51 = vector.load %arg3[%c0_12, %c0_13] : memref<8x128xf32, #tpu.memory_space<vmem>>, vector<8x128xf32>
    tpu.vector_store %arg3[%c0_12, %c0_13], %50 {strides = array<i32>} : memref<8x128xf32, #tpu.memory_space<vmem>>, vector<8x128xf32>,
    return
  }
  func.func @transform_0(%arg0: i32) -> (i32, i32) {
    %c0_i32 = arith.constant 0 : i32
    %c0_i32_0 = arith.constant 0 : i32
    return %c0_i32, %arg0 : i32, i32
  }
  func.func @transform_1(%arg0: i32) -> (i32, i32) {
    %c0_i32 = arith.constant 0 : i32
    %c0_i32_0 = arith.constant 0 : i32
    return %c0_i32, %arg0 : i32, i32
  }
  func.func @transform_2(%arg0: i32) -> (i32, i32) {
    %c0_i32 = arith.constant 0 : i32
    %c0_i32_0 = arith.constant 0 : i32
    return %c0_i32, %arg0 : i32, i32
  }
}

</mosaic_0001>

<llo_original>
// kernel: focal_loss.1
$region0: #{focal_loss.1}
  #allocation0 [shape = 'u32[]', space=smem, size = 0x4, offset = 0x4, fixed_abs, tag = 'smem constant byte address 0x4 - core index']
  #allocation1 [shape = 'u32[144,128]{1,0:T(1,128)}', space=vmem, size = 0x12000, scoped, tag = 'internal scratch']
  %s0 = inlined_call_operand.vmem [shape: f32[7,128], index: 0, kind: input, shape index: {}]
  %s1 = inlined_call_operand.vmem [shape: s32[1,128], index: 1, kind: input, shape index: {}]
  %s2 = inlined_call_operand.vmem [shape: f32[8,128], index: 2, kind: output, shape index: {}]
  %s3 = sld [smem:[#allocation0]]
  $region18: #{focal_loss.1} parent=0
    _
  %s5 = ssub.s32 1, %s3
  %s6 = scalar_select 0, %s5, %s3
  // Predicated region
  $region2: #{focal_loss.1} parent=0 // pred_check
    _
  $region3: #{focal_loss.1} parent=0 // pred_check_branch
    %8 = sbr.rel (0) target = $region5
  $region4: #{focal_loss.1} parent=0 // pred_region
    _
  $region5: #{focal_loss.1} parent=0 // pred_fallthru
    _
  // Predicated region
  $region6: #{focal_loss.1} parent=0 // pred_check
    _
  $region7: #{focal_loss.1} parent=0 // pred_check_branch
    %10 = sbr.rel (0) target = $region9
  $region8: #{focal_loss.1} parent=0 // pred_region
    _
  $region9: #{focal_loss.1} parent=0 // pred_fallthru
    _
  %v11 = vld [vmem:[%s0] sm:$0x7f]
  %v12 = vld [vmem:[%s1] sm:$0x1]
  %v13 = vlaneseq
  %v14 = vshrl.u32 %v13, 7
  %v15 = vlaneseq
  %v16 = vshrl.u32 %v15, 7
  %v17 = vsub.s32 0, %v16
  %v18 = vrot.slane %v12, %v17
  %vm19 = vcmp.eq.s32.totalorder %v14, %v18
  %v20 = vsel %vm19, 1, 0
  %v21 = vcvt.s32.f32 %v20
  %vm22 = vcmask 1046528
  %v23 = vsel %vm22, %v11, -inf
  %v24 = vrot.slane %v23, 4
  %v25 = vmax.f32 %v23, %v24
  %v26 = vrot.slane %v25, 2
  %v27 = vmax.f32 %v25, %v26
  %v28 = vrot.slane %v27, 1
  %v29 = vmax.f32 %v27, %v28
  %v30 = vsub.f32 %v11, %v29
  %v31 = vmul.f32 %v30, 1.442695
  %v32 = vpow.pop %v31
  %v33 = vsel %vm22, %v32, 0.0
  %v34 = vrot.slane %v33, 4
  %v35 = vadd.f32 %v33, %v34
  %v36 = vrot.slane %v35, 2
  %v37 = vadd.f32 %v35, %v36
  %v38 = vrot.slane %v37, 1
  %v39 = vadd.f32 %v37, %v38
  %v40 = vmul.f32 %v32, %v21
  %v41 = vsel %vm22, %v40, 0.0
  %v42 = vrot.slane %v41, 4
  %v43 = vadd.f32 %v41, %v42
  %v44 = vrot.slane %v43, 2
  %v45 = vadd.f32 %v43, %v44
  %v46 = vrot.slane %v45, 1
  %v47 = vadd.f32 %v45, %v46
  %v48 = vmul.f32 %v11, %v21
  %v49 = vsel %vm22, %v48, 0.0
  %v50 = vrot.slane %v49, 4
  %v51 = vadd.f32 %v49, %v50
  %v52 = vrot.slane %v51, 2
  %v53 = vadd.f32 %v51, %v52
  %v54 = vrot.slane %v53, 1
  %v55 = vadd.f32 %v53, %v54
  %v56 = vsub.f32 %v55, %v29
  %v57 = vlog2.pop %v39
  %v58 = vmul.f32 %v57, 0.6931472
  %v59 = vsub.f32 %v56, %v58
  %v60 = vrcp.pop %v39
  %v61 = vmul.f32 %v39, %v60
  %v62 = vsub.f32 2.0, %v61
  %v63 = vmul.f32 %v60, %v62
  %v64 = vmul.f32 %v47, %v63
  %v65 = vsub.f32 1.0, %v64
  %v66 = vmul.f32 %v65, %v65
  %v67 = vmul.f32 %v66, %v65
  %v68 = vmul.f32 %v67, %v59
  %v69 = vsub.f32 0.0, %v68
  %v70 = vlaneseq
  %v71 = vand.u32 %v70, 127
  %s72 = smul.u32 0, 128
  %v73 = vstv %s72
  %v74 = vadd.s32 %v71, %v73
  %vm75 = vcmp.lt.s32.totalorder %v74, 8
  %v76 = vsel %vm75, %v69, 0.0
  %vm77 = vcmask 1040384
  %v78 = vsel %vm77, %v76, 0.0
  %79 = vadd.xlane.f32.xlu0 %v78
  %v80 = vpop.xlane.xlu0 %79
  %v81 = vrot.slane %v80, 4
  %v82 = vadd.f32 %v80, %v81
  %v83 = vrot.slane %v82, 2
  %v84 = vadd.f32 %v82, %v83
  %v85 = vrot.slane %v84, 1
  %v86 = vadd.f32 %v84, %v85
  %s87 = vtos %v86
  %v88 = vstv %s87
  %89 = vst [vmem:[%s2] sm:$0xff] %v88
  // Predicated region
  $region10: #{focal_loss.1} parent=0 // pred_check
    _
  $region11: #{focal_loss.1} parent=0 // pred_check_branch
    %91 = sbr.rel (0) target = $region13
  $region12: #{focal_loss.1} parent=0 // pred_region
    _
  $region13: #{focal_loss.1} parent=0 // pred_fallthru
    _
  // Predicated region
  $region14: #{focal_loss.1} parent=0 // pred_check
    _
  $region15: #{focal_loss.1} parent=0 // pred_check_branch
    %93 = sbr.rel (0) target = $region17
  $region16: #{focal_loss.1} parent=0 // pred_region
    _
  $region17: #{focal_loss.1} parent=0 // pred_fallthru
    _

</llo_original>
